<compile_context>
chip_gen: v7x
topology: tpu7x:2x2x1
jax: 0.10.0
libtpu: 0.0.40
codegen_flags: <defaults>
</compile_context>

<pallas_src>
import jax
import jax.numpy as jnp
from jax.experimental import pallas as pl
from jax.experimental.pallas import tpu as pltpu


def propensity_kernel(x_ref, w1_ref, b1_ref, w2_ref, b2_ref, w3_ref, b3_ref, o_ref):
    # Hoist parameter reads once per grid step (JAX does not CSE broadcasts).
    w1 = w1_ref[...]          # (H, D_in) f32
    w2 = w2_ref[...]          # (H, H)    f32
    w3 = w3_ref[...]          # (H, 1)    f32
    b1 = b1_ref[...]          # (H, 1)    f32
    b2 = b2_ref[...]          # (H, 1)    f32
    b3 = b3_ref[...]          # (1, 1)    f32

    x = x_ref[...]            # (D_in, TILE_B) f32, batch on lanes

    # Layer 1: Linear (+ eval-mode dropout == identity) + ReLU.  -> (H, TILE_B)
    h1 = jnp.dot(w1, x, preferred_element_type=jnp.float32)
    h1 = jnp.maximum(h1 + b1, 0.0)

    # Layer 2: Linear (+ eval-mode dropout == identity) + ReLU.  -> (H, TILE_B)
    h2 = jnp.dot(w2, h1, preferred_element_type=jnp.float32)
    h2 = jnp.maximum(h2 + b2, 0.0)

    # Layer 3 (out_features == 1): VPU multiply + sublane reduce; result is
    # already lane-dense as a (1, TILE_B) row -> no relayout before the store.
    logits = jnp.sum(h2 * w3, axis=0, keepdims=True) + b3   # (1, TILE_B)
    o_ref[...] = jax.nn.sigmoid(logits).astype(o_ref.dtype)


def _round_up(n, m):
    return ((n + m - 1) // m) * m


def _choose_tile_b(B):
    bp = _round_up(max(B, 1), 128)
    tile = min(8192, bp)
    if bp >= 256:
        # Keep >= 2 grid steps so v7x can shard batch tiles over both TCs.
        tile = min(tile, _round_up(pl.cdiv(bp, 2), 128))
    return tile


def propensity_forward(x, w1, b1, w2, b2, w3, b3, *, tile_b=None):
    """x: (B, D_in) float32.
    Weights in PyTorch orientation: w1 (H, D_in), w2 (H, H), w3 (H, 1).
    Biases column-shaped: b1 (H, 1), b2 (H, 1), b3 (1, 1).
    Returns (B, 1) float32."""
    B, D_in = x.shape
    H = w1.shape[0]

    if tile_b is None:
        tile_b = _choose_tile_b(B)
    tile_b = _round_up(tile_b, 128)          # keep the output row lane-dense

    Bp = _round_up(max(B, 1), tile_b)
    num_tiles = Bp // tile_b

    # Batch-on-lanes HBM layout: (D_in, Bp) f32 — minor dim is the 128-multiple
    # batch, so per-tile x DMAs are fully dense (no lane padding).
    xt = jnp.pad(x.astype(jnp.float32).T, ((0, 0), (0, Bp - B)))

    const2 = lambda i: (0, 0)                # weights/biases resident in VMEM

    out = pl.pallas_call(
        propensity_kernel,
        grid=(num_tiles,),
        in_specs=[
            pl.BlockSpec((D_in, tile_b), lambda i: (0, i)),   # x: batch-tiled
            pl.BlockSpec(w1.shape, const2),
            pl.BlockSpec(b1.shape, const2),
            pl.BlockSpec(w2.shape, const2),
            pl.BlockSpec(b2.shape, const2),
            pl.BlockSpec(w3.shape, const2),
            pl.BlockSpec(b3.shape, const2),
        ],
        # Lane-dense output: one (1, TILE_B) row per tile.
        out_specs=pl.BlockSpec((1, tile_b), lambda i: (i, 0)),
        out_shape=jax.ShapeDtypeStruct((num_tiles, tile_b), jnp.float32),
        compiler_params=pltpu.CompilerParams(
            dimension_semantics=("parallel",)),   # shards across TCs on v7x
    )(xt, w1, b1, w2, b2, w3, b3)

    # (num_tiles, tile_b) -> (Bp, 1) preserving row order, drop padding rows.
    return out.reshape(Bp, 1)[:B]


def init_params(key, input_size, hidden_size):
    """Deterministic init mirroring the PyTorch module's __init__.
    layer1/layer2 weights: kaiming-normal (fan_in, gain=sqrt(2)).
    layer3 weight + all biases: PyTorch Linear default uniform."""
    k1, k2, k3, kb1, kb2, kb3 = jax.random.split(key, 6)

    # Kaiming normal, mode='fan_in': std = sqrt(2 / fan_in).
    std1 = (2.0 / input_size) ** 0.5
    std2 = (2.0 / hidden_size) ** 0.5
    # PyTorch orientation: (out_features, in_features).
    w1 = std1 * jax.random.normal(k1, (hidden_size, input_size), jnp.float32)
    w2 = std2 * jax.random.normal(k2, (hidden_size, hidden_size), jnp.float32)

    bound3 = 1.0 / (hidden_size ** 0.5)
    w3 = jax.random.uniform(k3, (hidden_size, 1), jnp.float32, -bound3, bound3)

    bound1 = 1.0 / (input_size ** 0.5)
    bound2 = 1.0 / (hidden_size ** 0.5)
    b1 = jax.random.uniform(kb1, (hidden_size, 1), jnp.float32, -bound1, bound1)
    b2 = jax.random.uniform(kb2, (hidden_size, 1), jnp.float32, -bound2, bound2)
    b3 = jax.random.uniform(kb3, (1, 1), jnp.float32, -bound3, bound3)

    return w1, b1, w2, b2, w3, b3


if __name__ == "__main__":
    key = jax.random.PRNGKey(0)
    kx, kp = jax.random.split(key)

    batch = 8
    input_size = 16   # number of covariates
    hidden_size = 32

    x = jax.random.normal(kx, (batch, input_size), jnp.float32)
    w1, b1, w2, b2, w3, b3 = init_params(kp, input_size, hidden_size)

    y = propensity_forward(x, w1, b1, w2, b2, w3, b3)
    y = jax.block_until_ready(y)

    # Sanity: shape and sigmoid range.
    assert y.shape == (batch, 1)
    assert bool(jnp.all((y >= 0.0) & (y <= 1.0)))

    # Cross-check against a plain-JAX f32 reference (same math as the PyTorch
    # eval-mode forward).
    h1 = jnp.maximum(jnp.dot(x, w1.T, preferred_element_type=jnp.float32)
                     + b1.reshape(1, -1), 0.0)
    h2 = jnp.maximum(jnp.dot(h1, w2.T, preferred_element_type=jnp.float32)
                     + b2.reshape(1, -1), 0.0)
    y_ref = jax.nn.sigmoid(jnp.dot(h2, w3, preferred_element_type=jnp.float32)
                           + b3.reshape(1, 1))
    assert bool(jnp.allclose(y, y_ref, atol=1e-4, rtol=1e-4))

    print("KERNEL_OK")
</pallas_src>

<mosaic_0001>
module attributes {stable_mosaic.version = 11 : i64} {
  func.func @propensity_kernel(%arg0: i32, %arg1: memref<16x128xf32, #tpu.memory_space<vmem>>, %arg2: memref<32x16xf32, #tpu.memory_space<vmem>>, %arg3: memref<32x1xf32, #tpu.memory_space<vmem>>, %arg4: memref<32x32xf32, #tpu.memory_space<vmem>>, %arg5: memref<32x1xf32, #tpu.memory_space<vmem>>, %arg6: memref<32x1xf32, #tpu.memory_space<vmem>>, %arg7: memref<1x1xf32, #tpu.memory_space<vmem>>, %arg8: memref<1x128xf32, #tpu.memory_space<vmem>>) attributes {dimension_semantics = [#tpu.dimension_semantics<parallel>], iteration_bounds = array<i64: 1>, scalar_prefetch = 0 : i64, scratch_operands = 0 : i64, tpu.core_type = #tpu.core_type<tc>, window_params = [{transform_indices = @transform_0, window_bounds = array<i64: 16, 128>}, {pipeline_mode = #tpu.pipeline_mode<synchronous>, transform_indices = @transform_1, window_bounds = array<i64: 32, 16>}, {pipeline_mode = #tpu.pipeline_mode<synchronous>, transform_indices = @transform_2, window_bounds = array<i64: 32, 1>}, {pipeline_mode = #tpu.pipeline_mode<synchronous>, transform_indices = @transform_3, window_bounds = array<i64: 32, 32>}, {pipeline_mode = #tpu.pipeline_mode<synchronous>, transform_indices = @transform_4, window_bounds = array<i64: 32, 1>}, {pipeline_mode = #tpu.pipeline_mode<synchronous>, transform_indices = @transform_5, window_bounds = array<i64: 32, 1>}, {pipeline_mode = #tpu.pipeline_mode<synchronous>, transform_indices = @transform_6, window_bounds = array<i64: 1, 1>}, {transform_indices = @transform_7, window_bounds = array<i64: 1, 128>}]} {
    %c0 = arith.constant 0 : index
    %c0_0 = arith.constant 0 : index
    %0 = vector.load %arg2[%c0, %c0_0] : memref<32x16xf32, #tpu.memory_space<vmem>>, vector<32x16xf32>
    %c0_1 = arith.constant 0 : index
    %c0_2 = arith.constant 0 : index
    %1 = vector.load %arg4[%c0_1, %c0_2] : memref<32x32xf32, #tpu.memory_space<vmem>>, vector<32x32xf32>
    %c0_3 = arith.constant 0 : index
    %c0_4 = arith.constant 0 : index
    %2 = vector.load %arg6[%c0_3, %c0_4] : memref<32x1xf32, #tpu.memory_space<vmem>>, vector<32x1xf32>
    %c0_5 = arith.constant 0 : index
    %c0_6 = arith.constant 0 : index
    %3 = vector.load %arg3[%c0_5, %c0_6] : memref<32x1xf32, #tpu.memory_space<vmem>>, vector<32x1xf32>
    %c0_7 = arith.constant 0 : index
    %c0_8 = arith.constant 0 : index
    %4 = vector.load %arg5[%c0_7, %c0_8] : memref<32x1xf32, #tpu.memory_space<vmem>>, vector<32x1xf32>
    %c0_9 = arith.constant 0 : index
    %c0_10 = arith.constant 0 : index
    %5 = vector.load %arg7[%c0_9, %c0_10] : memref<1x1xf32, #tpu.memory_space<vmem>>, vector<1x1xf32>
    %c0_11 = arith.constant 0 : index
    %c0_12 = arith.constant 0 : index
    %6 = vector.load %arg1[%c0_11, %c0_12] : memref<16x128xf32, #tpu.memory_space<vmem>>, vector<16x128xf32>
    %cst = arith.constant dense<0.000000e+00> : vector<32x128xf32>
    %7 = tpu.matmul %0, %6, %cst {dimension_numbers = #tpu.dot_dimension_numbers<[1], [0], [0], [1], [0, 0, 1, 1], [], []>} : vector<32x16xf32>, vector<16x128xf32>, vector<32x128xf32> -> vector<32x128xf32>
    %8 = vector.broadcast %3 : vector<32x1xf32> to vector<32x128xf32>
    %9 = arith.addf %7, %8 : vector<32x128xf32>
    %cst_13 = arith.constant 0.000000e+00 : f32
    %10 = vector.broadcast %cst_13 : f32 to vector<32x128xf32>
    %11 = arith.maximumf %9, %10 : vector<32x128xf32>
    %cst_14 = arith.constant dense<0.000000e+00> : vector<32x128xf32>
    %12 = tpu.matmul %1, %11, %cst_14 {dimension_numbers = #tpu.dot_dimension_numbers<[1], [0], [0], [1], [0, 0, 1, 1], [], []>} : vector<32x32xf32>, vector<32x128xf32>, vector<32x128xf32> -> vector<32x128xf32>
    %13 = vector.broadcast %4 : vector<32x1xf32> to vector<32x128xf32>
    %14 = arith.addf %12, %13 : vector<32x128xf32>
    %cst_15 = arith.constant 0.000000e+00 : f32
    %15 = vector.broadcast %cst_15 : f32 to vector<32x128xf32>
    %16 = arith.maximumf %14, %15 : vector<32x128xf32>
    %17 = vector.broadcast %2 : vector<32x1xf32> to vector<32x128xf32>
    %18 = arith.mulf %16, %17 : vector<32x128xf32>
    %cst_16 = arith.constant dense<0.000000e+00> : vector<128xf32>
    %19 = vector.multi_reduction <add>, %18, %cst_16 [0] : vector<32x128xf32> to vector<128xf32>
    %20 = vector.shape_cast %19 : vector<128xf32> to vector<1x128xf32>
    %21 = vector.broadcast %5 : vector<1x1xf32> to vector<1x128xf32>
    %22 = arith.addf %20, %21 : vector<1x128xf32>
    %23 = arith.negf %22 : vector<1x128xf32>
    %24 = math.exp %23 : vector<1x128xf32>
    %cst_17 = arith.constant 1.000000e+00 : f32
    %25 = vector.broadcast %cst_17 : f32 to vector<1x128xf32>
    %26 = arith.addf %25, %24 : vector<1x128xf32>
    %27 = arith.divf %25, %26 : vector<1x128xf32>
    %c0_18 = arith.constant 0 : index
    %c0_19 = arith.constant 0 : index
    %28 = vector.load %arg8[%c0_18, %c0_19] : memref<1x128xf32, #tpu.memory_space<vmem>>, vector<1x128xf32>
    tpu.vector_store %arg8[%c0_18, %c0_19], %27 {strides = array<i32>} : memref<1x128xf32, #tpu.memory_space<vmem>>, vector<1x128xf32>,
    return
  }
  func.func @transform_0(%arg0: i32) -> (i32, i32) {
    %c0_i32 = arith.constant 0 : i32
    %c0_i32_0 = arith.constant 0 : i32
    return %c0_i32, %arg0 : i32, i32
  }
  func.func @transform_1(%arg0: i32) -> (i32, i32) {
    %c0_i32 = arith.constant 0 : i32
    %c0_i32_0 = arith.constant 0 : i32
    %c0_i32_1 = arith.constant 0 : i32
    return %c0_i32, %c0_i32_0 : i32, i32
  }
  func.func @transform_2(%arg0: i32) -> (i32, i32) {
    %c0_i32 = arith.constant 0 : i32
    %c0_i32_0 = arith.constant 0 : i32
    %c0_i32_1 = arith.constant 0 : i32
    return %c0_i32, %c0_i32_0 : i32, i32
  }
  func.func @transform_3(%arg0: i32) -> (i32, i32) {
    %c0_i32 = arith.constant 0 : i32
    %c0_i32_0 = arith.constant 0 : i32
    %c0_i32_1 = arith.constant 0 : i32
    return %c0_i32, %c0_i32_0 : i32, i32
  }
  func.func @transform_4(%arg0: i32) -> (i32, i32) {
    %c0_i32 = arith.constant 0 : i32
    %c0_i32_0 = arith.constant 0 : i32
    %c0_i32_1 = arith.constant 0 : i32
    return %c0_i32, %c0_i32_0 : i32, i32
  }
  func.func @transform_5(%arg0: i32) -> (i32, i32) {
    %c0_i32 = arith.constant 0 : i32
    %c0_i32_0 = arith.constant 0 : i32
    %c0_i32_1 = arith.constant 0 : i32
    return %c0_i32, %c0_i32_0 : i32, i32
  }
  func.func @transform_6(%arg0: i32) -> (i32, i32) {
    %c0_i32 = arith.constant 0 : i32
    %c0_i32_0 = arith.constant 0 : i32
    %c0_i32_1 = arith.constant 0 : i32
    return %c0_i32, %c0_i32_0 : i32, i32
  }
  func.func @transform_7(%arg0: i32) -> (i32, i32) {
    %c0_i32 = arith.constant 0 : i32
    %c0_i32_0 = arith.constant 0 : i32
    return %arg0, %c0_i32 : i32, i32
  }
}

</mosaic_0001>

<llo_original>
// kernel: tpu_custom_call.1
$region0: #{tpu_custom_call.1}
  #allocation0 [shape = 'u32[]', space=smem, size = 0x4, offset = 0x4, fixed_abs, tag = 'smem constant byte address 0x4 - core index']
  #allocation1 [shape = 'u32[144,128]{1,0:T(1,128)}', space=vmem, size = 0x12000, scoped, tag = 'internal scratch']
  #allocation2 [shape = 'f32[1,1]{1,0:T(1,128)S(1)}', space=vmem, size = 0x200, scoped, tag = 'scoped memory for tpu_custom_call.1']
  %s0 = inlined_call_operand.vmem [shape: f32[16,128], index: 0, kind: input, shape index: {}]
  %s1 = inlined_call_operand.vmem [shape: f32[32,16], index: 1, kind: input, shape index: {}]
  %s2 = inlined_call_operand.vmem [shape: f32[32,1], index: 2, kind: input, shape index: {}]
  %s3 = inlined_call_operand.vmem [shape: f32[32,32], index: 3, kind: input, shape index: {}]
  %s4 = inlined_call_operand.vmem [shape: f32[32,1], index: 4, kind: input, shape index: {}]
  %s5 = inlined_call_operand.vmem [shape: f32[32,1], index: 5, kind: input, shape index: {}]
  %s6 = inlined_call_operand.<no memory space> [shape: f32[1,1], index: 6, kind: input, shape index: {}]
  %s7 = inlined_call_operand.hbm [shape: f32[1,128], index: 7, kind: output, shape index: {}]
  %s8 = sld [smem:[#allocation0]]
  $region38: #{tpu_custom_call.1} parent=0
    _
  %s10 = ssub.s32 1, %s8
  %s11 = scalar_select 0, %s10, %s8
  %v12 = vstv %s6
  %13 = vst [vmem:[#allocation2] sm:$0x1] %v12
  $region1: #{tpu_custom_call.1} parent=0
    #allocation3 [shape = 'u8[512]{0}', space=vmem, size = 0x400, scoped, tag = 'output window, operand 0, single buffered']
    #allocation4 [shape = 's32[1]{0}', space=sflag, size = 0x4, scoped, tag = 'scoped memory for tpu_custom_call.1']
    %14 = vsyncpa [#allocation4], 0
    // Predicated region
    $region2: #{tpu_custom_call.1} parent=1 // pred_check
      _
    $region3: #{tpu_custom_call.1} parent=1 // pred_check_branch
      %16 = sbr.rel (0) target = $region5
    $region4: #{tpu_custom_call.1} parent=1 // pred_region
      _
    $region5: #{tpu_custom_call.1} parent=1 // pred_fallthru
      _
    // Predicated region
    $region6: #{tpu_custom_call.1} parent=1 // pred_check
      _
    $region7: #{tpu_custom_call.1} parent=1 // pred_check_branch
      %18 = sbr.rel (0) target = $region9
    $region8: #{tpu_custom_call.1} parent=1 // pred_region
      _
    $region9: #{tpu_custom_call.1} parent=1 // pred_fallthru
      _
    // Predicated region
    $region10: #{tpu_custom_call.1} parent=1 // pred_check
      _
    $region11: #{tpu_custom_call.1} parent=1 // pred_check_branch
      %20 = sbr.rel (0) target = $region13
    $region12: #{tpu_custom_call.1} parent=1 // pred_region
      _
    $region13: #{tpu_custom_call.1} parent=1 // pred_fallthru
      _
    // Predicated region
    $region14: #{tpu_custom_call.1} parent=1 // pred_check
      _
    $region15: #{tpu_custom_call.1} parent=1 // pred_check_branch
      %22 = sbr.rel (0) target = $region17
    $region16: #{tpu_custom_call.1} parent=1 // pred_region
      _
    $region17: #{tpu_custom_call.1} parent=1 // pred_fallthru
      _
    // Predicated region
    $region18: #{tpu_custom_call.1} parent=1 // pred_check
      _
    $region19: #{tpu_custom_call.1} parent=1 // pred_check_branch
      %24 = sbr.rel (0) target = $region21
    $region20: #{tpu_custom_call.1} parent=1 // pred_region
      _
    $region21: #{tpu_custom_call.1} parent=1 // pred_fallthru
      _
    // Predicated region
    $region22: #{tpu_custom_call.1} parent=1 // pred_check
      _
    $region23: #{tpu_custom_call.1} parent=1 // pred_check_branch
      %26 = sbr.rel (0) target = $region25
    $region24: #{tpu_custom_call.1} parent=1 // pred_region
      _
    $region25: #{tpu_custom_call.1} parent=1 // pred_fallthru
      _
    // Predicated region
    $region26: #{tpu_custom_call.1} parent=1 // pred_check
      _
    $region27: #{tpu_custom_call.1} parent=1 // pred_check_branch
      %28 = sbr.rel (0) target = $region29
    $region28: #{tpu_custom_call.1} parent=1 // pred_region
      _
    $region29: #{tpu_custom_call.1} parent=1 // pred_fallthru
      _
    %v29 = vld [vmem:[%s1] sm:$0xff]
    %v30 = vld [vmem:[%s1 + $0x8] sm:$0xff]
    %v31 = vld [vmem:[%s1 + $0x10] sm:$0xff]
    %v32 = vld [vmem:[%s1 + $0x18] sm:$0xff]
    %v33 = vld [vmem:[%s3] sm:$0xff]
    %v34 = vld [vmem:[%s3 + $0x8] sm:$0xff]
    %v35 = vld [vmem:[%s3 + $0x10] sm:$0xff]
    %v36 = vld [vmem:[%s3 + $0x18] sm:$0xff]
    %v37 = vld [vmem:[%s5] sm:$0xff]
    %v38 = vld [vmem:[%s5 + $0x8] sm:$0xff]
    %v39 = vld [vmem:[%s5 + $0x10] sm:$0xff]
    %v40 = vld [vmem:[%s5 + $0x18] sm:$0xff]
    %v41 = vld [vmem:[%s2] sm:$0xff]
    %v42 = vld [vmem:[%s2 + $0x8] sm:$0xff]
    %v43 = vld [vmem:[%s2 + $0x10] sm:$0xff]
    %v44 = vld [vmem:[%s2 + $0x18] sm:$0xff]
    %v45 = vld [vmem:[%s4] sm:$0xff]
    %v46 = vld [vmem:[%s4 + $0x8] sm:$0xff]
    %v47 = vld [vmem:[%s4 + $0x10] sm:$0xff]
    %v48 = vld [vmem:[%s4 + $0x18] sm:$0xff]
    %v49 = vld [vmem:[#allocation2] sm:$0x1]
    %v50 = vld [vmem:[%s0] sm:$0xff]
    %v51 = vld [vmem:[%s0 + $0x8] sm:$0xff]
    %53 = vset.pattern.permute.xlu0 0
    %54 = vperm.xlu0 %53, %v41
    %v55 = vpop.permute.xlu0 %54
    %58 = vset.pattern.permute.xlu0 0
    %59 = vperm.xlu0 %58, %v42
    %v60 = vpop.permute.xlu0 %59
    %63 = vset.pattern.permute.xlu0 0
    %64 = vperm.xlu0 %63, %v43
    %v65 = vpop.permute.xlu0 %64
    %68 = vset.pattern.permute.xlu0 0
    %69 = vperm.xlu0 %68, %v44
    %v70 = vpop.permute.xlu0 %69
    %vm72 = vcmask 130048
    %v74 = vsel %vm72, %v29, 0
    %v77 = vsel %vm72, %v30, 0
    %v80 = vsel %vm72, %v31, 0
    %v83 = vsel %vm72, %v32, 0
    %85 = vmatprep.subr.mxu0 0.0
    %86 = vmatpush1.msra.mxu0 %v50
    %87 = vmatprep.subr.mxu0 0.0
    %88 = vmatpush1.msra.mxu0 %v51
    %89 = vmatprep.subr.mxu0 0.0
    %90 = vmatpush1.msra.mxu0 0.0
    %91 = vmatprep.subr.mxu0 0.0
    %92 = vmatpush1.msra.mxu0 0.0
    %93 = vmatprep.subr.mxu0 0.0
    %94 = vmatpush1.msra.mxu0 0.0
    %95 = vmatprep.subr.mxu0 0.0
    %96 = vmatpush1.msra.mxu0 0.0
    %97 = vmatprep.subr.mxu0 0.0
    %98 = vmatpush1.msra.mxu0 0.0
    %99 = vmatprep.subr.mxu0 0.0
    %100 = vmatpush1.msra.mxu0 0.0
    %101 = vmatprep.subr.mxu0 0.0
    %102 = vmatpush1.msra.mxu0 0.0
    %103 = vmatprep.subr.mxu0 0.0
    %104 = vmatpush1.msra.mxu0 0.0
    %105 = vmatprep.subr.mxu0 0.0
    %106 = vmatpush1.msra.mxu0 0.0
    %107 = vmatprep.subr.mxu0 0.0
    %108 = vmatpush1.msra.mxu0 0.0
    %109 = vmatprep.subr.mxu0 0.0
    %110 = vmatpush1.msra.mxu0 0.0
    %111 = vmatprep.subr.mxu0 0.0
    %112 = vmatpush1.msra.mxu0 0.0
    %113 = vmatprep.subr.mxu0 0.0
    %114 = vmatpush1.msra.mxu0 0.0
    %115 = vmatprep.subr.mxu0 0.0
    %116 = vmatpush1.msra.mxu0 0.0
    %117 = vmatprep.subr.mxu0 0.0
    %118 = vmatpush1.msra.mxu0 0.0
    %119 = vmatprep.subr.mxu0 0.0
    %120 = vmatpush1.msra.mxu0 0.0
    %121 = vmatprep.subr.mxu0 0.0
    %122 = vmatpush1.msra.mxu0 0.0
    %123 = vmatprep.subr.mxu0 0.0
    %124 = vmatpush1.msra.mxu0 0.0
    %125 = vmatprep.subr.mxu0 0.0
    %126 = vmatpush1.msra.mxu0 0.0
    %127 = vmatprep.subr.mxu0 0.0
    %128 = vmatpush1.msra.mxu0 0.0
    %129 = vmatprep.subr.mxu0 0.0
    %130 = vmatpush1.msra.mxu0 0.0
    %131 = vmatprep.subr.mxu0 0.0
    %132 = vmatpush1.msra.mxu0 0.0
    %133 = vmatprep.subr.mxu0 0.0
    %134 = vmatpush1.msra.mxu0 0.0
    %135 = vmatprep.subr.mxu0 0.0
    %136 = vmatpush1.msra.mxu0 0.0
    %137 = vmatprep.subr.mxu0 0.0
    %138 = vmatpush1.msra.mxu0 0.0
    %139 = vmatprep.subr.mxu0 0.0
    %140 = vmatpush1.msra.mxu0 0.0
    %141 = vmatprep.subr.mxu0 0.0
    %142 = vmatpush1.msra.mxu0 0.0
    %143 = vmatprep.subr.mxu0 0.0
    %144 = vmatpush1.msra.mxu0 0.0
    %145 = vmatprep.subr.mxu0 0.0
    %146 = vmatpush1.msra.mxu0 0.0
    %147 = vmatprep.subr.mxu0 0.0
    %148 = vmatpush1.msra.mxu0 0.0
    %149 = vmatprep.mubr.f32.mxu0 0.0
    %150 = vmatmul.mubr.f32.gmra.mrb[0].mxu0 %v74
    %v151 = vpop.f32.mrb[0].mxu0
    %v152 = vadd.f32 %v55, %v151
    %v153 = vpop.f32.mrb[0].mxu0
    %154 = vmatprep.mubr.f32.mxu0 0.0
    %155 = vmatmul.mubr.f32.gmra.mrb[0].mxu0 %v77
    %v156 = vpop.f32.mrb[0].mxu0
    %v157 = vadd.f32 %v60, %v156
    %v158 = vpop.f32.mrb[0].mxu0
    %159 = vmatprep.mubr.f32.mxu0 0.0
    %160 = vmatmul.mubr.f32.gmra.mrb[0].mxu0 %v80
    %v161 = vpop.f32.mrb[0].mxu0
    %v162 = vadd.f32 %v65, %v161
    %v163 = vpop.f32.mrb[0].mxu0
    %164 = vmatprep.mubr.f32.mxu0 0.0
    %165 = vmatmul.mubr.f32.gmra.mrb[0].mxu0 %v83
    %v166 = vpop.f32.mrb[0].mxu0
    %v167 = vadd.f32 %v70, %v166
    %v168 = vpop.f32.mrb[0].mxu0
    %169 = vdwg.mxu0
    %v170 = vmax.f32 %v152, 0.0
    %v171 = vmax.f32 %v157, 0.0
    %v172 = vmax.f32 %v162, 0.0
    %v173 = vmax.f32 %v167, 0.0
    %175 = vset.pattern.permute.xlu0 0
    %176 = vperm.xlu0 %175, %v45
    %v177 = vpop.permute.xlu0 %176
    %180 = vset.pattern.permute.xlu0 0
    %181 = vperm.xlu0 %180, %v46
    %v182 = vpop.permute.xlu0 %181
    %185 = vset.pattern.permute.xlu0 0
    %186 = vperm.xlu0 %185, %v47
    %v187 = vpop.permute.xlu0 %186
    %190 = vset.pattern.permute.xlu0 0
    %191 = vperm.xlu0 %190, %v48
    %v192 = vpop.permute.xlu0 %191
    %vm194 = vcmask 261120
    %v196 = vsel %vm194, %v33, 0
    %v199 = vsel %vm194, %v34, 0
    %v202 = vsel %vm194, %v35, 0
    %v205 = vsel %vm194, %v36, 0
    %207 = vmatprep.subr.mxu0 0.0
    %208 = vmatpush1.msra.mxu0 %v170
    %209 = vmatprep.subr.mxu0 0.0
    %210 = vmatpush1.msra.mxu0 %v171
    %211 = vmatprep.subr.mxu0 0.0
    %212 = vmatpush1.msra.mxu0 %v172
    %213 = vmatprep.subr.mxu0 0.0
    %214 = vmatpush1.msra.mxu0 %v173
    %215 = vmatprep.subr.mxu0 0.0
    %216 = vmatpush1.msra.mxu0 0.0
    %217 = vmatprep.subr.mxu0 0.0
    %218 = vmatpush1.msra.mxu0 0.0
    %219 = vmatprep.subr.mxu0 0.0
    %220 = vmatpush1.msra.mxu0 0.0
    %221 = vmatprep.subr.mxu0 0.0
    %222 = vmatpush1.msra.mxu0 0.0
    %223 = vmatprep.subr.mxu0 0.0
    %224 = vmatpush1.msra.mxu0 0.0
    %225 = vmatprep.subr.mxu0 0.0
    %226 = vmatpush1.msra.mxu0 0.0
    %227 = vmatprep.subr.mxu0 0.0
    %228 = vmatpush1.msra.mxu0 0.0
    %229 = vmatprep.subr.mxu0 0.0
    %230 = vmatpush1.msra.mxu0 0.0
    %231 = vmatprep.subr.mxu0 0.0
    %232 = vmatpush1.msra.mxu0 0.0
    %233 = vmatprep.subr.mxu0 0.0
    %234 = vmatpush1.msra.mxu0 0.0
    %235 = vmatprep.subr.mxu0 0.0
    %236 = vmatpush1.msra.mxu0 0.0
    %237 = vmatprep.subr.mxu0 0.0
    %238 = vmatpush1.msra.mxu0 0.0
    %239 = vmatprep.subr.mxu0 0.0
    %240 = vmatpush1.msra.mxu0 0.0
    %241 = vmatprep.subr.mxu0 0.0
    %242 = vmatpush1.msra.mxu0 0.0
    %243 = vmatprep.subr.mxu0 0.0
    %244 = vmatpush1.msra.mxu0 0.0
    %245 = vmatprep.subr.mxu0 0.0
    %246 = vmatpush1.msra.mxu0 0.0
    %247 = vmatprep.subr.mxu0 0.0
    %248 = vmatpush1.msra.mxu0 0.0
    %249 = vmatprep.subr.mxu0 0.0
    %250 = vmatpush1.msra.mxu0 0.0
    %251 = vmatprep.subr.mxu0 0.0
    %252 = vmatpush1.msra.mxu0 0.0
    %253 = vmatprep.subr.mxu0 0.0
    %254 = vmatpush1.msra.mxu0 0.0
    %255 = vmatprep.subr.mxu0 0.0
    %256 = vmatpush1.msra.mxu0 0.0
    %257 = vmatprep.subr.mxu0 0.0
    %258 = vmatpush1.msra.mxu0 0.0
    %259 = vmatprep.subr.mxu0 0.0
    %260 = vmatpush1.msra.mxu0 0.0
    %261 = vmatprep.subr.mxu0 0.0
    %262 = vmatpush1.msra.mxu0 0.0
    %263 = vmatprep.subr.mxu0 0.0
    %264 = vmatpush1.msra.mxu0 0.0
    %265 = vmatprep.subr.mxu0 0.0
    %266 = vmatpush1.msra.mxu0 0.0
    %267 = vmatprep.subr.mxu0 0.0
    %268 = vmatpush1.msra.mxu0 0.0
    %269 = vmatprep.subr.mxu0 0.0
    %270 = vmatpush1.msra.mxu0 0.0
    %271 = vmatprep.mubr.f32.mxu0 0.0
    %272 = vmatmul.mubr.f32.gmra.mrb[0].mxu0 %v196
    %v273 = vpop.f32.mrb[0].mxu0
    %v274 = vadd.f32 %v177, %v273
    %v275 = vpop.f32.mrb[0].mxu0
    %276 = vmatprep.mubr.f32.mxu0 0.0
    %277 = vmatmul.mubr.f32.gmra.mrb[0].mxu0 %v199
    %v278 = vpop.f32.mrb[0].mxu0
    %v279 = vadd.f32 %v182, %v278
    %v280 = vpop.f32.mrb[0].mxu0
    %281 = vmatprep.mubr.f32.mxu0 0.0
    %282 = vmatmul.mubr.f32.gmra.mrb[0].mxu0 %v202
    %v283 = vpop.f32.mrb[0].mxu0
    %v284 = vadd.f32 %v187, %v283
    %v285 = vpop.f32.mrb[0].mxu0
    %286 = vmatprep.mubr.f32.mxu0 0.0
    %287 = vmatmul.mubr.f32.gmra.mrb[0].mxu0 %v205
    %v288 = vpop.f32.mrb[0].mxu0
    %v289 = vadd.f32 %v192, %v288
    %v290 = vpop.f32.mrb[0].mxu0
    %291 = vdwg.mxu0
    %v292 = vmax.f32 %v274, 0.0
    %v293 = vmax.f32 %v279, 0.0
    %v294 = vmax.f32 %v284, 0.0
    %v295 = vmax.f32 %v289, 0.0
    %297 = vset.pattern.permute.xlu0 0
    %298 = vperm.xlu0 %297, %v37
    %v299 = vpop.permute.xlu0 %298
    %302 = vset.pattern.permute.xlu0 0
    %303 = vperm.xlu0 %302, %v38
    %v304 = vpop.permute.xlu0 %303
    %307 = vset.pattern.permute.xlu0 0
    %308 = vperm.xlu0 %307, %v39
    %v309 = vpop.permute.xlu0 %308
    %312 = vset.pattern.permute.xlu0 0
    %313 = vperm.xlu0 %312, %v40
    %v314 = vpop.permute.xlu0 %313
    %v316 = vmul.f32 %v292, %v299
    %v317 = vmul.f32 %v293, %v304
    %v318 = vmul.f32 %v294, %v309
    %v319 = vmul.f32 %v295, %v314
    %v320 = vadd.f32 %v316, %v317
    %v321 = vadd.f32 %v320, %v318
    %v322 = vadd.f32 %v321, %v319
    %v323 = vrot.slane %v322, 4
    %v324 = vadd.f32 %v322, %v323
    %v325 = vrot.slane %v324, 2
    %v326 = vadd.f32 %v324, %v325
    %v327 = vrot.slane %v326, 1
    %v328 = vadd.f32 %v326, %v327
    %330 = vset.pattern.permute.xlu0 0
    %331 = vperm.xlu0 %330, %v49
    %v332 = vpop.permute.xlu0 %331
    %v334 = vlaneseq
    %v335 = vshrl.u32 %v334, 7
    %v336 = vsub.s32 0, %v335
    %v337 = vrot.slane %v332, %v336
    %v338 = vadd.f32 %v328, %v337
    %v339 = vxor.u32 %v338, 2147483648
    %v340 = vmul.f32 %v339, 1.442695
    %v341 = vpow.pop %v340
    %v342 = vadd.f32 %v341, 1.0
    %v343 = vrcp.pop %v342
    %v344 = vmul.f32 1.0, %v343
    %345 = vst [vmem:[#allocation3] sm:$0x1] %v344
    // Predicated region
    $region30: #{tpu_custom_call.1} parent=1 // pred_check
      _
    $region31: #{tpu_custom_call.1} parent=1 // pred_check_branch
      %347 = sbr.rel (0) target = $region33
    $region32: #{tpu_custom_call.1} parent=1 // pred_region
      %s349 = ssub.s32 16, 16
      %350 = vsyncadd [#allocation4], %s349
      %s352 = sshll.u32 [#allocation3], 4
      %s353 = int_to_ptr.vmem [resolvable:$true] %s352
      %355 = dma.vmem_to_hbm [thread:$0]  %s353, 16, %s7, [#allocation4]
    $region33: #{tpu_custom_call.1} parent=1 // pred_fallthru
      _
    // Predicated region
    $region34: #{tpu_custom_call.1} parent=1 // pred_check
      _
    $region35: #{tpu_custom_call.1} parent=1 // pred_check_branch
      %357 = sbr.rel (0) target = $region37
    $region36: #{tpu_custom_call.1} parent=1 // pred_region
      %358 = dma.done [#allocation4], 16
    $region37: #{tpu_custom_call.1} parent=1 // pred_fallthru
      _
    %359 = vsyncpa [#allocation4], 1

</llo_original>
